<compile_context>
chip_gen: v5e
topology: v5e:2x2
jax: 0.10.0
libtpu: 0.0.40
codegen_flags: <defaults>
</compile_context>

<pallas_src>
import functools
import math

import jax
import jax.numpy as jnp
from jax.experimental import pallas as pl
from jax.experimental.pallas import tpu as pltpu


def _layernorm_kernel(x_ref, gamma_ref, beta_ref, o_ref, *, eps, n_elems,
                      var_denom, affine):
    # x_ref: (TB, N) lane-dense block; one flattened sample per row.
    x = x_ref[...].astype(jnp.float32)

    # Single fused pass: per-row sum and sum-of-squares.
    s = jnp.sum(x, axis=-1, keepdims=True)          # (TB, 1)
    sq = jnp.sum(x * x, axis=-1, keepdims=True)     # (TB, 1)
    mean = s * (1.0 / n_elems)
    # Unbiased variance (N-1, matching torch .std()); guard tiny negatives from
    # cancellation in the fused E[x^2] - E[x]^2 form.
    var = jnp.maximum(sq - n_elems * mean * mean, 0.0) * (1.0 / var_denom)
    std = jnp.sqrt(var)
    # eps added to std (not inside sqrt) to match the reference module.
    inv = 1.0 / (std + eps)                          # per-row: exact & cheap

    if affine:
        g = gamma_ref[...].astype(jnp.float32)       # (1, N) channel vals repeated over HW
        b = beta_ref[...].astype(jnp.float32)        # (1, N)
        scale = g * inv                              # (TB, N)
        shift = b - mean * scale                     # (TB, N)
        y = x * scale + shift                        # one FMA per element
    else:
        y = (x - mean) * inv

    o_ref[...] = y.astype(o_ref.dtype)


def layer_norm(x, gamma=None, beta=None, *, eps=1e-5, affine=True):
    """x: (B, C, *spatial). gamma/beta: (C,). Returns same shape/dtype as x."""
    orig_shape = x.shape
    B, C = x.shape[0], x.shape[1]
    HW = int(math.prod(x.shape[2:]))
    N = C * HW

    x2 = x.reshape(B, N)

    if gamma is None:
        gamma = jnp.ones((C,), jnp.float32)
    if beta is None:
        beta = jnp.zeros((C,), jnp.float32)
    # Lane-dense per-element affine rows (per-channel value repeated over HW).
    gamma_row = jnp.broadcast_to(gamma.reshape(C, 1), (C, HW)).reshape(1, N)
    beta_row = jnp.broadcast_to(beta.reshape(C, 1), (C, HW)).reshape(1, N)

    # ---- tile sizing -------------------------------------------------------
    # Rows per grid step: multiple of 8 sublanes, one input block <= ~2 MiB f32
    # so double-buffered in/out + f32 temps fit on v7x's 64 MiB VMEM too.
    block_budget_bytes = 2 * 1024 * 1024
    rows_by_vmem = max(8, (block_budget_bytes // (N * 4)) // 8 * 8)
    tb = min(256, rows_by_vmem)
    b_pad8 = ((B + 7) // 8) * 8
    tb = min(tb, b_pad8)
    # Keep >= 2 grid steps when the batch allows it (v7x has 2 TensorCores).
    if b_pad8 // tb < 2 and b_pad8 >= 16:
        tb = max(8, ((b_pad8 // 2) // 8) * 8)
    Bp = ((B + tb - 1) // tb) * tb
    # TODO(synk): for very large samples (N*4B per row >> VMEM budget) switch to
    # an HW-tiled two-pass reduction (grid over chunks of N with VMEM accumulators).

    if Bp != B:
        x2 = jnp.pad(x2, ((0, Bp - B), (0, 0)))  # zero rows: finite stats, sliced off

    kernel = functools.partial(
        _layernorm_kernel,
        eps=float(eps),
        n_elems=float(N),
        var_denom=float(max(N - 1, 1)),
        affine=affine,
    )

    out = pl.pallas_call(
        kernel,
        out_shape=jax.ShapeDtypeStruct((Bp, N), x.dtype),
        grid_spec=pltpu.PrefetchScalarGridSpec(
            num_scalar_prefetch=0,
            grid=(Bp // tb,),
            in_specs=[
                pl.BlockSpec((tb, N), lambda i: (i, 0)),
                pl.BlockSpec((1, N), lambda i: (0, 0)),
                pl.BlockSpec((1, N), lambda i: (0, 0)),
            ],
            out_specs=pl.BlockSpec((tb, N), lambda i: (i, 0)),
        ),
        compiler_params=pltpu.CompilerParams(
            dimension_semantics=("parallel",),
            vmem_limit_bytes=32 * 1024 * 1024,
        ),
    )(x2, gamma_row, beta_row)

    return out[:B].reshape(orig_shape)


def _reference(x, gamma, beta, eps=1e-5):
    # Pure-JAX reference mirroring the PyTorch forward exactly.
    B = x.shape[0]
    flat = x.reshape(B, -1).astype(jnp.float32)
    mean = flat.mean(axis=1).reshape(B, 1, 1, 1)
    std = jnp.sqrt(
        jnp.sum((flat - flat.mean(axis=1, keepdims=True)) ** 2, axis=1)
        / (flat.shape[1] - 1)
    ).reshape(B, 1, 1, 1)
    y = (x.astype(jnp.float32) - mean) / (std + eps)
    y = gamma.reshape(1, -1, 1, 1) * y + beta.reshape(1, -1, 1, 1)
    return y.astype(x.dtype)


if __name__ == "__main__":
    key = jax.random.PRNGKey(0)
    kx, kg = jax.random.split(key)

    B, C, H, W = 2, 4, 16, 16
    x = jax.random.normal(kx, (B, C, H, W), dtype=jnp.float32)

    # Deterministic params (mirrors nn.Parameter(Tensor(C).uniform_()) / zeros)
    gamma = jax.random.uniform(kg, (C,), dtype=jnp.float32)
    beta = jnp.zeros((C,), dtype=jnp.float32)

    y = layer_norm(x, gamma, beta, eps=1e-5, affine=True)
    y = jax.block_until_ready(y)

    y_ref = _reference(x, gamma, beta, eps=1e-5)
    assert y.shape == x.shape and y.dtype == x.dtype
    assert jnp.allclose(y, y_ref, atol=2e-5, rtol=2e-5), "mismatch vs reference"

    print("KERNEL_OK")
</pallas_src>

<mosaic_0001>
module attributes {stable_mosaic.version = 11 : i64} {
  func.func @_layernorm_kernel(%arg0: i32, %arg1: memref<8x1024xf32, #tpu.memory_space<vmem>>, %arg2: memref<1x1024xf32, #tpu.memory_space<vmem>>, %arg3: memref<1x1024xf32, #tpu.memory_space<vmem>>, %arg4: memref<8x1024xf32, #tpu.memory_space<vmem>>) attributes {dimension_semantics = [#tpu.dimension_semantics<parallel>], iteration_bounds = array<i64: 1>, scalar_prefetch = 0 : i64, scratch_operands = 0 : i64, tpu.core_type = #tpu.core_type<tc>, window_params = [{transform_indices = @transform_0, window_bounds = array<i64: 8, 1024>}, {pipeline_mode = #tpu.pipeline_mode<synchronous>, transform_indices = @transform_1, window_bounds = array<i64: 1, 1024>}, {pipeline_mode = #tpu.pipeline_mode<synchronous>, transform_indices = @transform_2, window_bounds = array<i64: 1, 1024>}, {transform_indices = @transform_3, window_bounds = array<i64: 8, 1024>}]} {
    %c0 = arith.constant 0 : index
    %c0_0 = arith.constant 0 : index
    %0 = vector.load %arg1[%c0, %c0_0] : memref<8x1024xf32, #tpu.memory_space<vmem>>, vector<8x1024xf32>
    %cst = arith.constant dense<0.000000e+00> : vector<8xf32>
    %1 = vector.multi_reduction <add>, %0, %cst [1] : vector<8x1024xf32> to vector<8xf32>
    %2 = vector.shape_cast %1 : vector<8xf32> to vector<8x1xf32>
    %3 = arith.mulf %0, %0 : vector<8x1024xf32>
    %cst_1 = arith.constant dense<0.000000e+00> : vector<8xf32>
    %4 = vector.multi_reduction <add>, %3, %cst_1 [1] : vector<8x1024xf32> to vector<8xf32>
    %5 = vector.shape_cast %4 : vector<8xf32> to vector<8x1xf32>
    %cst_2 = arith.constant 9.765625E-4 : f32
    %6 = vector.broadcast %cst_2 : f32 to vector<8x1xf32>
    %7 = arith.mulf %2, %6 : vector<8x1xf32>
    %cst_3 = arith.constant 1.024000e+03 : f32
    %8 = vector.broadcast %cst_3 : f32 to vector<8x1xf32>
    %9 = arith.mulf %8, %7 : vector<8x1xf32>
    %10 = arith.mulf %9, %7 : vector<8x1xf32>
    %11 = arith.subf %5, %10 : vector<8x1xf32>
    %cst_4 = arith.constant 0.000000e+00 : f32
    %12 = vector.broadcast %cst_4 : f32 to vector<8x1xf32>
    %13 = arith.maximumf %11, %12 : vector<8x1xf32>
    %cst_5 = arith.constant 9.77517105E-4 : f32
    %14 = vector.broadcast %cst_5 : f32 to vector<8x1xf32>
    %15 = arith.mulf %13, %14 : vector<8x1xf32>
    %16 = math.sqrt %15 : vector<8x1xf32>
    %cst_6 = arith.constant 9.99999974E-6 : f32
    %17 = vector.broadcast %cst_6 : f32 to vector<8x1xf32>
    %18 = arith.addf %16, %17 : vector<8x1xf32>
    %cst_7 = arith.constant 1.000000e+00 : f32
    %19 = vector.broadcast %cst_7 : f32 to vector<8x1xf32>
    %20 = arith.divf %19, %18 : vector<8x1xf32>
    %c0_8 = arith.constant 0 : index
    %c0_9 = arith.constant 0 : index
    %21 = vector.load %arg2[%c0_8, %c0_9] : memref<1x1024xf32, #tpu.memory_space<vmem>>, vector<1x1024xf32>
    %c0_10 = arith.constant 0 : index
    %c0_11 = arith.constant 0 : index
    %22 = vector.load %arg3[%c0_10, %c0_11] : memref<1x1024xf32, #tpu.memory_space<vmem>>, vector<1x1024xf32>
    %23 = vector.broadcast %21 : vector<1x1024xf32> to vector<8x1024xf32>
    %24 = vector.broadcast %20 : vector<8x1xf32> to vector<8x1024xf32>
    %25 = arith.mulf %23, %24 : vector<8x1024xf32>
    %26 = vector.broadcast %7 : vector<8x1xf32> to vector<8x1024xf32>
    %27 = arith.mulf %26, %25 : vector<8x1024xf32>
    %28 = vector.broadcast %22 : vector<1x1024xf32> to vector<8x1024xf32>
    %29 = arith.subf %28, %27 : vector<8x1024xf32>
    %30 = arith.mulf %0, %25 : vector<8x1024xf32>
    %31 = arith.addf %30, %29 : vector<8x1024xf32>
    %c0_12 = arith.constant 0 : index
    %c0_13 = arith.constant 0 : index
    %32 = vector.load %arg4[%c0_12, %c0_13] : memref<8x1024xf32, #tpu.memory_space<vmem>>, vector<8x1024xf32>
    tpu.vector_store %arg4[%c0_12, %c0_13], %31 {strides = array<i32>} : memref<8x1024xf32, #tpu.memory_space<vmem>>, vector<8x1024xf32>,
    return
  }
  func.func @transform_0(%arg0: i32) -> (i32, i32) {
    %c0_i32 = arith.constant 0 : i32
    %c0_i32_0 = arith.constant 0 : i32
    return %arg0, %c0_i32 : i32, i32
  }
  func.func @transform_1(%arg0: i32) -> (i32, i32) {
    %c0_i32 = arith.constant 0 : i32
    %c0_i32_0 = arith.constant 0 : i32
    %c0_i32_1 = arith.constant 0 : i32
    return %c0_i32, %c0_i32_0 : i32, i32
  }
  func.func @transform_2(%arg0: i32) -> (i32, i32) {
    %c0_i32 = arith.constant 0 : i32
    %c0_i32_0 = arith.constant 0 : i32
    %c0_i32_1 = arith.constant 0 : i32
    return %c0_i32, %c0_i32_0 : i32, i32
  }
  func.func @transform_3(%arg0: i32) -> (i32, i32) {
    %c0_i32 = arith.constant 0 : i32
    %c0_i32_0 = arith.constant 0 : i32
    return %arg0, %c0_i32 : i32, i32
  }
}

</mosaic_0001>

<llo_original>
// kernel: tpu_custom_call.1
$region0: #{tpu_custom_call.1}
  #allocation0 [shape = 'u32[]', space=smem, size = 0x4, offset = 0x4, fixed_abs, tag = 'smem constant byte address 0x4 - core index']
  #allocation1 [shape = 'u32[72,128]{1,0:T(1,128)}', space=vmem, size = 0x9000, scoped, tag = 'internal scratch']
  %s0 = inlined_call_operand.hbm [shape: f32[8,1024], index: 0, kind: input, shape index: {}]
  %s1 = inlined_call_operand.hbm [shape: f32[1,1024], index: 1, kind: input, shape index: {}]
  %s2 = inlined_call_operand.hbm [shape: f32[1,1024], index: 2, kind: input, shape index: {}]
  %s3 = inlined_call_operand.hbm [shape: f32[8,1024], index: 3, kind: output, shape index: {}]
  %s4 = sld [smem:[#allocation0]]
  $region34: #{tpu_custom_call.1} parent=0
    _
  %s6 = ssub.s32 1, %s4
  %s7 = scalar_select 0, %s6, %s4
  $region1: #{tpu_custom_call.1} parent=0
    #allocation2 [shape = 'u8[32768]{0}', space=vmem, size = 0x8000, scoped, tag = 'input window, operand 0, single buffered']
    #allocation3 [shape = 's32[1]{0}', space=sflag, size = 0x4, scoped, tag = 'scoped memory for tpu_custom_call.1']
    #allocation4 [shape = 's32[1]{0}', space=sflag, size = 0x4, scoped, tag = 'scoped memory for tpu_custom_call.1']
    #allocation5 [shape = 'u8[4096]{0}', space=vmem, size = 0x1000, scoped, tag = 'input window, operand 1, single buffered']
    #allocation6 [shape = 's32[1]{0}', space=sflag, size = 0x4, scoped, tag = 'scoped memory for tpu_custom_call.1']
    #allocation7 [shape = 'u8[4096]{0}', space=vmem, size = 0x1000, scoped, tag = 'input window, operand 2, single buffered']
    #allocation8 [shape = 'u8[32768]{0}', space=vmem, size = 0x8000, scoped, tag = 'output window, operand 0, single buffered']
    %8 = vsyncpa [#allocation3], 0
    %9 = vsyncpa [#allocation6], 0
    %10 = vsyncpa [#allocation4], 0
    // Predicated region
    $region2: #{tpu_custom_call.1} parent=1 // pred_check
      _
    $region3: #{tpu_custom_call.1} parent=1 // pred_check_branch
      %12 = sbr.rel (0) target = $region5
    $region4: #{tpu_custom_call.1} parent=1 // pred_region
      %14 = vsyncadd [#allocation3], 0
      %s16 = sshll.u32 %s0, 4
      %s17 = int_to_ptr.hbm [resolvable:$true] %s16
      %s18 = sshll.u32 [#allocation2], 4
      %s19 = int_to_ptr.vmem [resolvable:$true] %s18
      %21 = dma.hbm_to_vmem [thread:$0]  %s17, 1024, %s19, [#allocation3]
    $region5: #{tpu_custom_call.1} parent=1 // pred_fallthru
      _
    // Predicated region
    $region6: #{tpu_custom_call.1} parent=1 // pred_check
      _
    $region7: #{tpu_custom_call.1} parent=1 // pred_check_branch
      %23 = sbr.rel (0) target = $region9
    $region8: #{tpu_custom_call.1} parent=1 // pred_region
      %25 = vsyncadd [#allocation6], 0
      %s27 = sshll.u32 %s1, 4
      %s28 = int_to_ptr.hbm [resolvable:$true] %s27
      %s29 = sshll.u32 [#allocation5], 4
      %s30 = int_to_ptr.vmem [resolvable:$true] %s29
      %32 = dma.hbm_to_vmem [thread:$0]  %s28, 128, %s30, [#allocation6]
    $region9: #{tpu_custom_call.1} parent=1 // pred_fallthru
      _
    // Predicated region
    $region10: #{tpu_custom_call.1} parent=1 // pred_check
      _
    $region11: #{tpu_custom_call.1} parent=1 // pred_check_branch
      %34 = sbr.rel (0) target = $region13
    $region12: #{tpu_custom_call.1} parent=1 // pred_region
      %36 = vsyncadd [#allocation6], 0
      %s38 = sshll.u32 %s2, 4
      %s39 = int_to_ptr.hbm [resolvable:$true] %s38
      %s40 = sshll.u32 [#allocation7], 4
      %s41 = int_to_ptr.vmem [resolvable:$true] %s40
      %43 = dma.hbm_to_vmem [thread:$0]  %s39, 128, %s41, [#allocation6]
    $region13: #{tpu_custom_call.1} parent=1 // pred_fallthru
      _
    // Predicated region
    $region14: #{tpu_custom_call.1} parent=1 // pred_check
      _
    $region15: #{tpu_custom_call.1} parent=1 // pred_check_branch
      %45 = sbr.rel (0) target = $region17
    $region16: #{tpu_custom_call.1} parent=1 // pred_region
      %47 = dma.done [#allocation3], 1024
    $region17: #{tpu_custom_call.1} parent=1 // pred_fallthru
      _
    // Predicated region
    $region18: #{tpu_custom_call.1} parent=1 // pred_check
      _
    $region19: #{tpu_custom_call.1} parent=1 // pred_check_branch
      %49 = sbr.rel (0) target = $region21
    $region20: #{tpu_custom_call.1} parent=1 // pred_region
      %51 = dma.done [#allocation6], 128
    $region21: #{tpu_custom_call.1} parent=1 // pred_fallthru
      _
    // Predicated region
    $region22: #{tpu_custom_call.1} parent=1 // pred_check
      _
    $region23: #{tpu_custom_call.1} parent=1 // pred_check_branch
      %53 = sbr.rel (0) target = $region25
    $region24: #{tpu_custom_call.1} parent=1 // pred_region
      %55 = dma.done [#allocation6], 128
    $region25: #{tpu_custom_call.1} parent=1 // pred_fallthru
      _
    %v56 = vld [vmem:[#allocation2] sm:$0xff]
    %v57 = vld [vmem:[#allocation2 + $0x8] sm:$0xff]
    %v58 = vld [vmem:[#allocation2 + $0x10] sm:$0xff]
    %v59 = vld [vmem:[#allocation2 + $0x18] sm:$0xff]
    %v60 = vld [vmem:[#allocation2 + $0x20] sm:$0xff]
    %v61 = vld [vmem:[#allocation2 + $0x28] sm:$0xff]
    %v62 = vld [vmem:[#allocation2 + $0x30] sm:$0xff]
    %v63 = vld [vmem:[#allocation2 + $0x38] sm:$0xff]
    %v64 = vadd.f32 %v56, %v57
    %v65 = vadd.f32 %v64, %v58
    %v66 = vadd.f32 %v65, %v59
    %v67 = vadd.f32 %v66, %v60
    %v68 = vadd.f32 %v67, %v61
    %v69 = vadd.f32 %v68, %v62
    %v70 = vadd.f32 %v69, %v63
    %71 = vadd.xlane.f32.xlu0 %v70
    %v72 = vpop.xlane.xlu0 %71
    %v73 = vmul.f32 %v56, %v56
    %v74 = vmul.f32 %v57, %v57
    %v75 = vmul.f32 %v58, %v58
    %v76 = vmul.f32 %v59, %v59
    %v77 = vmul.f32 %v60, %v60
    %v78 = vmul.f32 %v61, %v61
    %v79 = vmul.f32 %v62, %v62
    %v80 = vmul.f32 %v63, %v63
    %v81 = vadd.f32 %v73, %v74
    %v82 = vadd.f32 %v81, %v75
    %v83 = vadd.f32 %v82, %v76
    %v84 = vadd.f32 %v83, %v77
    %v85 = vadd.f32 %v84, %v78
    %v86 = vadd.f32 %v85, %v79
    %v87 = vadd.f32 %v86, %v80
    %88 = vadd.xlane.f32.xlu0 %v87
    %v89 = vpop.xlane.xlu0 %88
    %v90 = vmul.f32 %v72, 0.0009765625
    %v91 = vmul.f32 %v90, 1024.0
    %v92 = vmul.f32 %v91, %v90
    %v93 = vsub.f32 %v89, %v92
    %v94 = vmax.f32 %v93, 0.0
    %v95 = vmul.f32 %v94, 0.0009775171
    %v96 = vrsqrt.pop %v95
    %v97 = vmul.f32 %v96, %v95
    %v98 = vmul.f32 %v97, %v96
    %v99 = vmul.f32 0.5, %v98
    %v100 = vsub.f32 1.5, %v99
    %v101 = vmul.f32 %v96, %v100
    %v102 = vmul.f32 %v95, %v101
    %vm103 = vcmp.eq.f32.partialorder %v95, inf
    %v104 = vsel %vm103, %v95, %v102
    %vm105 = vcmp.eq.f32.partialorder %v95, 0.0
    %v106 = vand.u32 %v95, 2147483648
    %v107 = vsel %vm105, %v106, %v104
    %v108 = vadd.f32 %v107, 1e-05
    %v109 = vrcp.pop %v108
    %v110 = vmul.f32 %v108, %v109
    %v111 = vsub.f32 1.0, %v110
    %v112 = vmul.f32 %v109, %v111
    %v113 = vadd.f32 %v109, %v112
    %vm114 = vweird.f32 %v108
    %vm115 = vweird.f32 %v109
    %vm116 = vmor %vm114, %vm115
    %v117 = vsel %vm116, %v109, %v113
    %v118 = vand.u32 2147483647, %v108
    %vm119 = vcmp.eq.f32.partialorder %v118, 8.507059e+37
    %v120 = vand.u32 %v108, 2147483648
    %v121 = vor.u32 1.1754944e-38, %v120
    %v122 = vsel %vm119, %v121, %v117
    %v123 = vmul.f32 1.0, %v122
    %v124 = vld [vmem:[#allocation5] sm:$0xff]
    %v125 = vld [vmem:[#allocation7] sm:$0xff]
    %v127 = vperm.slane %v124, 0
    %v128 = vperm.slane %v124, 1
    %v129 = vperm.slane %v124, 2
    %v130 = vperm.slane %v124, 3
    %v131 = vperm.slane %v124, 4
    %v132 = vperm.slane %v124, 5
    %v133 = vperm.slane %v124, 6
    %v134 = vperm.slane %v124, 7
    %v143 = vmul.f32 %v127, %v123
    %v144 = vmul.f32 %v128, %v123
    %v145 = vmul.f32 %v129, %v123
    %v146 = vmul.f32 %v130, %v123
    %v147 = vmul.f32 %v131, %v123
    %v148 = vmul.f32 %v132, %v123
    %v149 = vmul.f32 %v133, %v123
    %v150 = vmul.f32 %v134, %v123
    %v151 = vmul.f32 %v90, %v143
    %v152 = vmul.f32 %v90, %v144
    %v153 = vmul.f32 %v90, %v145
    %v154 = vmul.f32 %v90, %v146
    %v155 = vmul.f32 %v90, %v147
    %v156 = vmul.f32 %v90, %v148
    %v157 = vmul.f32 %v90, %v149
    %v158 = vmul.f32 %v90, %v150
    %v160 = vperm.slane %v125, 0
    %v161 = vperm.slane %v125, 1
    %v162 = vperm.slane %v125, 2
    %v163 = vperm.slane %v125, 3
    %v164 = vperm.slane %v125, 4
    %v165 = vperm.slane %v125, 5
    %v166 = vperm.slane %v125, 6
    %v167 = vperm.slane %v125, 7
    %v176 = vsub.f32 %v160, %v151
    %v177 = vsub.f32 %v161, %v152
    %v178 = vsub.f32 %v162, %v153
    %v179 = vsub.f32 %v163, %v154
    %v180 = vsub.f32 %v164, %v155
    %v181 = vsub.f32 %v165, %v156
    %v182 = vsub.f32 %v166, %v157
    %v183 = vsub.f32 %v167, %v158
    %v184 = vmul.f32 %v56, %v143
    %v185 = vmul.f32 %v57, %v144
    %v186 = vmul.f32 %v58, %v145
    %v187 = vmul.f32 %v59, %v146
    %v188 = vmul.f32 %v60, %v147
    %v189 = vmul.f32 %v61, %v148
    %v190 = vmul.f32 %v62, %v149
    %v191 = vmul.f32 %v63, %v150
    %v192 = vadd.f32 %v184, %v176
    %v193 = vadd.f32 %v185, %v177
    %v194 = vadd.f32 %v186, %v178
    %v195 = vadd.f32 %v187, %v179
    %v196 = vadd.f32 %v188, %v180
    %v197 = vadd.f32 %v189, %v181
    %v198 = vadd.f32 %v190, %v182
    %v199 = vadd.f32 %v191, %v183
    %200 = vst [vmem:[#allocation8] sm:$0xff] %v192
    %201 = vst [vmem:[#allocation8 + $0x8] sm:$0xff] %v193
    %202 = vst [vmem:[#allocation8 + $0x10] sm:$0xff] %v194
    %203 = vst [vmem:[#allocation8 + $0x18] sm:$0xff] %v195
    %204 = vst [vmem:[#allocation8 + $0x20] sm:$0xff] %v196
    %205 = vst [vmem:[#allocation8 + $0x28] sm:$0xff] %v197
    %206 = vst [vmem:[#allocation8 + $0x30] sm:$0xff] %v198
    %207 = vst [vmem:[#allocation8 + $0x38] sm:$0xff] %v199
    // Predicated region
    $region26: #{tpu_custom_call.1} parent=1 // pred_check
      _
    $region27: #{tpu_custom_call.1} parent=1 // pred_check_branch
      %209 = sbr.rel (0) target = $region29
    $region28: #{tpu_custom_call.1} parent=1 // pred_region
      %211 = vsyncadd [#allocation4], 0
      %s213 = sshll.u32 [#allocation8], 4
      %s214 = int_to_ptr.vmem [resolvable:$true] %s213
      %s215 = sshll.u32 %s3, 4
      %s216 = int_to_ptr.hbm [resolvable:$true] %s215
      %218 = dma.vmem_to_hbm [thread:$0]  %s214, 1024, %s216, [#allocation4]
    $region29: #{tpu_custom_call.1} parent=1 // pred_fallthru
      _
    // Predicated region
    $region30: #{tpu_custom_call.1} parent=1 // pred_check
      _
    $region31: #{tpu_custom_call.1} parent=1 // pred_check_branch
      %220 = sbr.rel (0) target = $region33
    $region32: #{tpu_custom_call.1} parent=1 // pred_region
      %222 = dma.done [#allocation4], 1024
    $region33: #{tpu_custom_call.1} parent=1 // pred_fallthru
      _
    %223 = vsyncpa [#allocation3], 1
    %224 = vsyncpa [#allocation6], 1
    %225 = vsyncpa [#allocation4], 1

</llo_original>
